<compile_context>
chip_gen: v7x
topology: tpu7x:2x2x1
jax: 0.10.0
libtpu: 0.0.40
codegen_flags: <defaults>
</compile_context>

<pallas_src>
import functools

import jax
import jax.numpy as jnp
from jax import lax
from jax.experimental import pallas as pl
from jax.experimental.pallas import tpu as pltpu


# ---------------------------------------------------------------------------
# VectorQuantizerEMA forward kernel (transposed, NCHW-native formulation)
# ---------------------------------------------------------------------------
def _vq_kernel(x_ref, en2_ref, embt_ref, e2_ref,
               q_ref, idx_ref, err_ref, cnt_ref, *, use_bf16_dist=False):
    x = x_ref[...]          # (D, TS) f32  one batch element, TS spatial columns
    en2 = en2_ref[...]      # (K, D)  f32  -2 * codebook (pre-scaled in wrapper)
    et = embt_ref[...]      # (D, K)  f32  codebook, pre-transposed in wrapper
    e2 = e2_ref[...]        # (K, 1)  f32  ||e_k||^2, precomputed in wrapper

    k = en2.shape[0]
    ts = x.shape[1]

    # distances^T up to the per-column constant ||x_j||^2 (argmin-invariant):
    #   dist[k, j] = ||e_k||^2 - 2 <e_k, x_j>
    if use_bf16_dist:
        # Optional bf16 distance matmul (argmin near-ties may flip); default off.
        xe = jnp.dot(en2.astype(jnp.bfloat16), x.astype(jnp.bfloat16),
                     preferred_element_type=jnp.float32)              # (K, TS)
    else:
        xe = jnp.dot(en2, x, preferred_element_type=jnp.float32)      # (K, TS) MXU
    dist = e2 + xe                                                    # (K, TS)

    # argmin over the code axis (sublanes) with first-min tie-breaking,
    # matching torch.argmin.
    row = lax.broadcasted_iota(jnp.int32, (k, ts), 0)                 # (K, TS)
    min_d = jnp.min(dist, axis=0, keepdims=True)                      # (1, TS)
    idx = jnp.min(jnp.where(dist == min_d, row, k), axis=0,
                  keepdims=True)                                      # (1, TS) int32

    enc = (row == idx).astype(jnp.float32)                            # (K, TS) one-hot^T
    q = jnp.dot(et, enc, preferred_element_type=jnp.float32)          # (D, TS) MXU

    q_ref[...] = q                                                    # lane-dense store
    idx_ref[...] = idx                                                # lane-dense store

    # Per-tile partials (reduced in the wrapper) -> no output-resident
    # accumulators, both grid axes stay fully parallel.
    #   ||q_j - x_j||^2 == min_d_j + ||x_j||^2   (exact, given dropped ||x||^2)
    x2 = jnp.sum(x * x, axis=0, keepdims=True)                        # (1, TS)
    err_ref[...] = jnp.sum(min_d + x2, axis=1, keepdims=True)         # (1, 1) scalar
    cnt_ref[...] = jnp.sum(enc, axis=1).reshape(1, k)                 # (1, K) lane-major


def _vmem_budget(k, d):
    """Per-generation VMEM limit and spatial-tile byte budget."""
    try:
        cap = pltpu.get_tpu_info().vmem_capacity_bytes
    except Exception:
        cap = 64 * 1024 * 1024  # conservative (v7x per-TC size)
    vmem_limit = min(int(cap * 0.7), 100 * 1024 * 1024)
    # Constant inputs (codebook*-2, codebook^T, ||e||^2) are double-buffered by
    # the auto-pipeline; account for them before sizing the spatial tile.
    # TODO(synk): for very large codebooks on v7x, mark the constant in_specs
    # with pipeline_mode=pl.Buffered(1) and drop the duplicated transpose.
    const_bytes = 2 * 4 * (2 * k * d + k)
    tile_budget = max(2 * 1024 * 1024, vmem_limit // 2 - const_bytes)
    return vmem_limit, tile_budget


def _choose_spatial_tile(hw_pad, d, k, budget_bytes):
    """Largest lane-dense spatial tile dividing hw_pad under a VMEM byte budget."""
    # per-column f32 footprint: x/q blocks double-buffered, idx, live temps
    # (xe/dist/enc/iota ~ 4K) and x*x (D).
    bytes_per_col = 4 * (2 * (2 * d + 1) + 4 * k + d)
    max_cols = max(128, (budget_bytes // bytes_per_col) // 128 * 128)
    ts = min(hw_pad, max_cols)
    while hw_pad % ts != 0:
        ts -= 128
    return ts


def vq_ema_forward(inputs_nchw, embedding, commitment_cost, *, use_bf16_dist=False):
    """Eval-mode forward of VectorQuantizerEMA.

    inputs_nchw: (B, C, H, W) float32, C == embedding_dim
    embedding:   (K, C) float32 codebook
    Returns (loss, quantized_nchw, perplexity, flat_indices).
    (ExtendedModel discards the encodings output, so nearest-code indices are
     returned instead of the (N, K) one-hot matrix.)
    """
    B, C, H, W = inputs_nchw.shape
    K, D = embedding.shape
    assert C == D, "channel dim must equal embedding_dim"
    HW = H * W

    # NCHW-native: only a free reshape, no transpose passes over HBM.
    x = inputs_nchw.reshape(B, C, HW).astype(jnp.float32)
    emb = embedding.astype(jnp.float32)
    en2 = -2.0 * emb                                         # fold the -2 (exact)
    embt = jnp.transpose(emb)                                # (D, K), tiny, once
    e2 = jnp.sum(emb * emb, axis=1, keepdims=True)           # (K, 1), hoisted

    # lane-align the spatial axis; padded (zero) columns are corrected exactly
    # in the wrapper below.
    HW_pad = ((HW + 127) // 128) * 128
    pad = HW_pad - HW
    if pad:
        x = jnp.pad(x, ((0, 0), (0, 0), (0, pad)))

    vmem_limit, tile_budget = _vmem_budget(K, D)
    ts = _choose_spatial_tile(HW_pad, D, K, tile_budget)
    n_s = HW_pad // ts
    grid = (B, n_s)

    kernel = functools.partial(_vq_kernel, use_bf16_dist=use_bf16_dist)

    q, idx, err_p, cnt_p = pl.pallas_call(
        kernel,
        grid=grid,
        in_specs=[
            pl.BlockSpec((None, D, ts), lambda b, s: (b, 0, s)),   # x slab
            pl.BlockSpec((K, D), lambda b, s: (0, 0)),             # -2 * codebook
            pl.BlockSpec((D, K), lambda b, s: (0, 0)),             # codebook^T
            pl.BlockSpec((K, 1), lambda b, s: (0, 0)),             # ||e||^2
        ],
        out_specs=[
            pl.BlockSpec((None, D, ts), lambda b, s: (b, 0, s)),         # quantized
            pl.BlockSpec((None, 1, ts), lambda b, s: (b, 0, s)),         # indices
            pl.BlockSpec((None, None, 1, 1), lambda b, s: (b, s, 0, 0)),  # err partial
            pl.BlockSpec((None, None, 1, K), lambda b, s: (b, s, 0, 0)),  # cnt partial
        ],
        out_shape=(
            jax.ShapeDtypeStruct((B, C, HW_pad), jnp.float32),
            jax.ShapeDtypeStruct((B, 1, HW_pad), jnp.int32),
            jax.ShapeDtypeStruct((B, n_s, 1, 1), jnp.float32),
            jax.ShapeDtypeStruct((B, n_s, 1, K), jnp.float32),
        ),
        compiler_params=pltpu.CompilerParams(
            dimension_semantics=("parallel", "parallel"),
            vmem_limit_bytes=vmem_limit,
        ),
    )(x, en2, embt, e2)

    # scalar finalization in plain JAX
    counts = jnp.sum(cnt_p, axis=(0, 1)).reshape(K)
    err_total = jnp.sum(err_p)
    if pad:
        # zero-padded columns land exactly on argmin(||e||^2) with err = min(||e||^2)
        e2f = e2.reshape(K)
        k0 = jnp.argmin(e2f)
        counts = counts.at[k0].add(-(B * pad))
        err_total = err_total - (B * pad) * e2f[k0]

    N = B * HW
    e_latent_loss = err_total / (N * D)               # == F.mse_loss(quantized, inputs)
    loss = commitment_cost * e_latent_loss

    quantized_nchw = q[:, :, :HW].reshape(B, C, H, W)  # free reshape, already NCHW

    avg_probs = counts / N
    perplexity = jnp.exp(-jnp.sum(avg_probs * jnp.log(avg_probs + 1e-10)))

    flat_indices = idx[:, :, :HW].reshape(B * HW)      # same ordering as NHWC-flat
    return loss, quantized_nchw, perplexity, flat_indices


# ---------------------------------------------------------------------------
# Classifier: fused Linear/ReLU/Linear/ReLU/Linear/Sigmoid (Dropout = eval noop)
# ---------------------------------------------------------------------------
def _classifier_kernel(x_ref, w1_ref, b1_ref, w2_ref, b2_ref, w3_ref, b3_ref,
                       o_ref):
    x = x_ref[...]                                                   # (1, F)
    h = jnp.dot(x, w1_ref[...], preferred_element_type=jnp.float32) + b1_ref[...]
    h = jnp.maximum(h, 0.0)
    # TODO(synk): Dropout(0.5) is identity in eval mode; training-mode masking
    # is not implemented.
    h = jnp.dot(h, w2_ref[...], preferred_element_type=jnp.float32) + b2_ref[...]
    h = jnp.maximum(h, 0.0)
    logits = jnp.dot(h, w3_ref[...], preferred_element_type=jnp.float32) + b3_ref[...]
    o_ref[...] = 1.0 / (1.0 + jnp.exp(-logits))                      # sigmoid


def classifier_forward(x_flat, params):
    """Eval-mode Classifier forward on (B, F) features.

    Batch-parallel grid so both TensorCores are used on v7x.
    TODO(synk): for production-scale F, tile the F contraction with an
    'arbitrary' grid axis + VMEM accumulator instead of a single-block w1, and
    consider fusing the first contraction into the VQ kernel epilogue to avoid
    the second HBM pass over `quantized`.
    """
    (w1, b1), (w2, b2), (w3, b3) = params
    B, F = x_flat.shape
    H1 = w1.shape[1]
    H2 = w2.shape[1]
    O = w3.shape[1]
    x3 = x_flat.reshape(B, 1, F).astype(jnp.float32)
    out = pl.pallas_call(
        _classifier_kernel,
        grid=(B,),
        in_specs=[
            pl.BlockSpec((None, 1, F), lambda b: (b, 0, 0)),
            pl.BlockSpec((F, H1), lambda b: (0, 0)),
            pl.BlockSpec((1, H1), lambda b: (0, 0)),
            pl.BlockSpec((H1, H2), lambda b: (0, 0)),
            pl.BlockSpec((1, H2), lambda b: (0, 0)),
            pl.BlockSpec((H2, O), lambda b: (0, 0)),
            pl.BlockSpec((1, O), lambda b: (0, 0)),
        ],
        out_specs=pl.BlockSpec((None, 1, O), lambda b: (b, 0, 0)),
        out_shape=jax.ShapeDtypeStruct((B, 1, O), jnp.float32),
        compiler_params=pltpu.CompilerParams(
            dimension_semantics=("parallel",)),
    )(x3, w1, b1.reshape(1, -1), w2, b2.reshape(1, -1), w3, b3.reshape(1, -1))
    return out.reshape(B, O)


# ---------------------------------------------------------------------------
# ExtendedModel.forward (eval), minus encoder/decoder (undefined in the spec)
# ---------------------------------------------------------------------------
def extended_model_forward(x_nchw, embedding, commitment_cost, classifier_params):
    # TODO(synk): self.model._encoder / _decoder are not defined in the spec;
    # x is treated as the encoder output z and x_recon is not produced.
    loss, quantized, perplexity, indices = vq_ema_forward(
        x_nchw, embedding, commitment_cost)
    b = quantized.shape[0]
    classifier_output = classifier_forward(quantized.reshape(b, -1),
                                           classifier_params)
    return loss, quantized, perplexity, classifier_output, indices


# ---------------------------------------------------------------------------
# Pure-JAX references (mirror the PyTorch eval forward)
# ---------------------------------------------------------------------------
def _vq_reference(inputs_nchw, embedding, commitment_cost):
    B, C, H, W = inputs_nchw.shape
    flat = jnp.transpose(inputs_nchw, (0, 2, 3, 1)).reshape(-1, C)
    d = (jnp.sum(flat ** 2, axis=1, keepdims=True)
         + jnp.sum(embedding ** 2, axis=1)
         - 2.0 * flat @ embedding.T)
    idx = jnp.argmin(d, axis=1)
    enc = jax.nn.one_hot(idx, embedding.shape[0], dtype=jnp.float32)
    q = enc @ embedding
    e_latent_loss = jnp.mean((q - flat) ** 2)
    loss = commitment_cost * e_latent_loss
    q_nchw = jnp.transpose(q.reshape(B, H, W, C), (0, 3, 1, 2))
    avg_probs = jnp.mean(enc, axis=0)
    perplexity = jnp.exp(-jnp.sum(avg_probs * jnp.log(avg_probs + 1e-10)))
    return loss, q_nchw, perplexity, idx.astype(jnp.int32)


def _classifier_reference(x_flat, params):
    (w1, b1), (w2, b2), (w3, b3) = params
    h = jnp.maximum(x_flat @ w1 + b1, 0.0)
    h = jnp.maximum(h @ w2 + b2, 0.0)
    logits = h @ w3 + b3
    return 1.0 / (1.0 + jnp.exp(-logits))


if __name__ == "__main__":
    # small, deterministic demo shapes consistent with the module
    num_embeddings = 16
    embedding_dim = 4          # channels
    commitment_cost = 0.25
    B, H, W = 2, 16, 16
    hidden_dim = 32
    num_classes = 1

    key = jax.random.PRNGKey(0)
    k_emb, k_x, k_w1, k_w2, k_w3 = jax.random.split(key, 5)

    # nn.Embedding(...).weight.data.normal_() -> standard normal codebook
    embedding = jax.random.normal(k_emb, (num_embeddings, embedding_dim),
                                  dtype=jnp.float32)
    # NCHW input, channels == embedding_dim
    x = jax.random.normal(k_x, (B, embedding_dim, H, W), dtype=jnp.float32)

    feat = embedding_dim * H * W
    w1 = 0.05 * jax.random.normal(k_w1, (feat, hidden_dim), dtype=jnp.float32)
    b1 = jnp.zeros((hidden_dim,), jnp.float32)
    w2 = 0.05 * jax.random.normal(k_w2, (hidden_dim, hidden_dim // 2),
                                  dtype=jnp.float32)
    b2 = jnp.zeros((hidden_dim // 2,), jnp.float32)
    w3 = 0.05 * jax.random.normal(k_w3, (hidden_dim // 2, num_classes),
                                  dtype=jnp.float32)
    b3 = jnp.zeros((num_classes,), jnp.float32)
    clf_params = ((w1, b1), (w2, b2), (w3, b3))

    loss, quantized, perplexity, clf_out, indices = extended_model_forward(
        x, embedding, commitment_cost, clf_params)
    jax.block_until_ready((loss, quantized, perplexity, clf_out, indices))

    # sanity check against pure-JAX references
    r_loss, r_q, r_ppl, r_idx = _vq_reference(x, embedding, commitment_cost)
    r_clf = _classifier_reference(r_q.reshape(B, -1), clf_params)

    assert jnp.array_equal(indices, r_idx), "nearest-code indices mismatch"
    assert jnp.allclose(quantized, r_q, atol=1e-5), "quantized mismatch"
    assert jnp.allclose(loss, r_loss, atol=1e-4), (loss, r_loss)
    assert jnp.allclose(perplexity, r_ppl, atol=1e-4), (perplexity, r_ppl)
    assert jnp.allclose(clf_out, r_clf, atol=1e-5), "classifier output mismatch"

    print("KERNEL_OK")
</pallas_src>

<mosaic_0001>
module attributes {stable_mosaic.version = 11 : i64} {
  func.func @_vq_kernel(%arg0: i32, %arg1: i32, %arg2: memref<1x4x256xf32, #tpu.memory_space<vmem>>, %arg3: memref<16x4xf32, #tpu.memory_space<vmem>>, %arg4: memref<4x16xf32, #tpu.memory_space<vmem>>, %arg5: memref<16x1xf32, #tpu.memory_space<vmem>>, %arg6: memref<1x4x256xf32, #tpu.memory_space<vmem>>, %arg7: memref<1x1x256xi32, #tpu.memory_space<vmem>>, %arg8: memref<1x1x1x1xf32, #tpu.memory_space<vmem>>, %arg9: memref<1x1x1x16xf32, #tpu.memory_space<vmem>>) attributes {dimension_semantics = [#tpu.dimension_semantics<parallel>, #tpu.dimension_semantics<parallel>], iteration_bounds = array<i64: 2, 1>, scalar_prefetch = 0 : i64, scratch_operands = 0 : i64, tpu.core_type = #tpu.core_type<tc>, window_params = [{transform_indices = @transform_0, window_bounds = array<i64: 1, 4, 256>}, {pipeline_mode = #tpu.pipeline_mode<synchronous>, transform_indices = @transform_1, window_bounds = array<i64: 16, 4>}, {pipeline_mode = #tpu.pipeline_mode<synchronous>, transform_indices = @transform_2, window_bounds = array<i64: 4, 16>}, {pipeline_mode = #tpu.pipeline_mode<synchronous>, transform_indices = @transform_3, window_bounds = array<i64: 16, 1>}, {transform_indices = @transform_4, window_bounds = array<i64: 1, 4, 256>}, {transform_indices = @transform_5, window_bounds = array<i64: 1, 1, 256>}, {transform_indices = @transform_6, window_bounds = array<i64: 1, 1, 1, 1>}, {transform_indices = @transform_7, window_bounds = array<i64: 1, 1, 1, 16>}]} {
    %c0 = arith.constant 0 : index
    %c0_0 = arith.constant 0 : index
    %c0_1 = arith.constant 0 : index
    %0 = vector.load %arg2[%c0, %c0_0, %c0_1] : memref<1x4x256xf32, #tpu.memory_space<vmem>>, vector<1x4x256xf32>
    %1 = vector.shape_cast %0 : vector<1x4x256xf32> to vector<4x256xf32>
    %c0_2 = arith.constant 0 : index
    %c0_3 = arith.constant 0 : index
    %2 = vector.load %arg3[%c0_2, %c0_3] : memref<16x4xf32, #tpu.memory_space<vmem>>, vector<16x4xf32>
    %c0_4 = arith.constant 0 : index
    %c0_5 = arith.constant 0 : index
    %3 = vector.load %arg4[%c0_4, %c0_5] : memref<4x16xf32, #tpu.memory_space<vmem>>, vector<4x16xf32>
    %c0_6 = arith.constant 0 : index
    %c0_7 = arith.constant 0 : index
    %4 = vector.load %arg5[%c0_6, %c0_7] : memref<16x1xf32, #tpu.memory_space<vmem>>, vector<16x1xf32>
    %cst = arith.constant dense<0.000000e+00> : vector<16x256xf32>
    %5 = tpu.matmul %2, %1, %cst {dimension_numbers = #tpu.dot_dimension_numbers<[1], [0], [0], [1], [0, 0, 1, 1], [], []>} : vector<16x4xf32>, vector<4x256xf32>, vector<16x256xf32> -> vector<16x256xf32>
    %6 = vector.broadcast %4 : vector<16x1xf32> to vector<16x256xf32>
    %7 = arith.addf %6, %5 : vector<16x256xf32>
    %8 = tpu.iota {dimensions = array<i32: 0>} : vector<16x256xi32>
    %cst_8 = arith.constant dense<0x7F800000> : vector<256xf32>
    %9 = vector.multi_reduction <minimumf>, %7, %cst_8 [0] : vector<16x256xf32> to vector<256xf32>
    %10 = vector.shape_cast %9 : vector<256xf32> to vector<1x256xf32>
    %11 = vector.broadcast %10 : vector<1x256xf32> to vector<16x256xf32>
    %12 = arith.cmpf oeq, %7, %11 : vector<16x256xf32>
    %c16_i32 = arith.constant 16 : i32
    %13 = vector.broadcast %c16_i32 : i32 to vector<16x256xi32>
    %14 = arith.select %12, %8, %13 : vector<16x256xi1>, vector<16x256xi32>
    %cst_9 = arith.constant dense<2147483647> : vector<256xi32>
    %15 = vector.multi_reduction <minsi>, %14, %cst_9 [0] : vector<16x256xi32> to vector<256xi32>
    %16 = vector.shape_cast %15 : vector<256xi32> to vector<1x256xi32>
    %17 = vector.broadcast %16 : vector<1x256xi32> to vector<16x256xi32>
    %18 = arith.cmpi eq, %8, %17 : vector<16x256xi32>
    %19 = arith.extui %18 : vector<16x256xi1> to vector<16x256xi32>
    %20 = arith.sitofp %19 : vector<16x256xi32> to vector<16x256xf32>
    %cst_10 = arith.constant dense<0.000000e+00> : vector<4x256xf32>
    %21 = tpu.matmul %3, %20, %cst_10 {dimension_numbers = #tpu.dot_dimension_numbers<[1], [0], [0], [1], [0, 0, 1, 1], [], []>} : vector<4x16xf32>, vector<16x256xf32>, vector<4x256xf32> -> vector<4x256xf32>
    %c0_11 = arith.constant 0 : index
    %c0_12 = arith.constant 0 : index
    %c0_13 = arith.constant 0 : index
    %22 = vector.load %arg6[%c0_11, %c0_12, %c0_13] : memref<1x4x256xf32, #tpu.memory_space<vmem>>, vector<1x4x256xf32>
    %23 = vector.shape_cast %22 : vector<1x4x256xf32> to vector<4x256xf32>
    %24 = vector.shape_cast %21 : vector<4x256xf32> to vector<1x4x256xf32>
    tpu.vector_store %arg6[%c0_11, %c0_12, %c0_13], %24 {strides = array<i32>} : memref<1x4x256xf32, #tpu.memory_space<vmem>>, vector<1x4x256xf32>,
    %c0_14 = arith.constant 0 : index
    %c0_15 = arith.constant 0 : index
    %c0_16 = arith.constant 0 : index
    %25 = vector.load %arg7[%c0_14, %c0_15, %c0_16] : memref<1x1x256xi32, #tpu.memory_space<vmem>>, vector<1x1x256xi32>
    %26 = vector.shape_cast %25 : vector<1x1x256xi32> to vector<1x256xi32>
    %27 = vector.shape_cast %16 : vector<1x256xi32> to vector<1x1x256xi32>
    tpu.vector_store %arg7[%c0_14, %c0_15, %c0_16], %27 {strides = array<i32>} : memref<1x1x256xi32, #tpu.memory_space<vmem>>, vector<1x1x256xi32>,
    %28 = arith.mulf %1, %1 : vector<4x256xf32>
    %cst_17 = arith.constant dense<0.000000e+00> : vector<256xf32>
    %29 = vector.multi_reduction <add>, %28, %cst_17 [0] : vector<4x256xf32> to vector<256xf32>
    %30 = vector.shape_cast %29 : vector<256xf32> to vector<1x256xf32>
    %31 = arith.addf %10, %30 : vector<1x256xf32>
    %cst_18 = arith.constant dense<0.000000e+00> : vector<1xf32>
    %32 = vector.multi_reduction <add>, %31, %cst_18 [1] : vector<1x256xf32> to vector<1xf32>
    %33 = vector.shape_cast %32 : vector<1xf32> to vector<1x1xf32>
    %c0_19 = arith.constant 0 : index
    %c0_20 = arith.constant 0 : index
    %c0_21 = arith.constant 0 : index
    %c0_22 = arith.constant 0 : index
    %34 = vector.load %arg8[%c0_19, %c0_20, %c0_21, %c0_22] : memref<1x1x1x1xf32, #tpu.memory_space<vmem>>, vector<1x1x1x1xf32>
    %35 = vector.shape_cast %34 : vector<1x1x1x1xf32> to vector<1x1xf32>
    %36 = vector.shape_cast %33 : vector<1x1xf32> to vector<1x1x1x1xf32>
    tpu.vector_store %arg8[%c0_19, %c0_20, %c0_21, %c0_22], %36 {strides = array<i32>} : memref<1x1x1x1xf32, #tpu.memory_space<vmem>>, vector<1x1x1x1xf32>,
    %cst_23 = arith.constant dense<0.000000e+00> : vector<16xf32>
    %37 = vector.multi_reduction <add>, %20, %cst_23 [1] : vector<16x256xf32> to vector<16xf32>
    %38 = vector.shape_cast %37 : vector<16xf32> to vector<1x16xf32>
    %c0_24 = arith.constant 0 : index
    %c0_25 = arith.constant 0 : index
    %c0_26 = arith.constant 0 : index
    %c0_27 = arith.constant 0 : index
    %39 = vector.load %arg9[%c0_24, %c0_25, %c0_26, %c0_27] : memref<1x1x1x16xf32, #tpu.memory_space<vmem>>, vector<1x1x1x16xf32>
    %40 = vector.shape_cast %39 : vector<1x1x1x16xf32> to vector<1x16xf32>
    %41 = vector.shape_cast %38 : vector<1x16xf32> to vector<1x1x1x16xf32>
    tpu.vector_store %arg9[%c0_24, %c0_25, %c0_26, %c0_27], %41 {strides = array<i32>} : memref<1x1x1x16xf32, #tpu.memory_space<vmem>>, vector<1x1x1x16xf32>,
    return
  }
  func.func @transform_0(%arg0: i32, %arg1: i32) -> (i32, i32, i32) {
    %c0_i32 = arith.constant 0 : i32
    %c0_i32_0 = arith.constant 0 : i32
    return %arg0, %c0_i32, %arg1 : i32, i32, i32
  }
  func.func @transform_1(%arg0: i32, %arg1: i32) -> (i32, i32) {
    %c0_i32 = arith.constant 0 : i32
    %c0_i32_0 = arith.constant 0 : i32
    %c0_i32_1 = arith.constant 0 : i32
    return %c0_i32, %c0_i32_0 : i32, i32
  }
  func.func @transform_2(%arg0: i32, %arg1: i32) -> (i32, i32) {
    %c0_i32 = arith.constant 0 : i32
    %c0_i32_0 = arith.constant 0 : i32
    %c0_i32_1 = arith.constant 0 : i32
    return %c0_i32, %c0_i32_0 : i32, i32
  }
  func.func @transform_3(%arg0: i32, %arg1: i32) -> (i32, i32) {
    %c0_i32 = arith.constant 0 : i32
    %c0_i32_0 = arith.constant 0 : i32
    %c0_i32_1 = arith.constant 0 : i32
    return %c0_i32, %c0_i32_0 : i32, i32
  }
  func.func @transform_4(%arg0: i32, %arg1: i32) -> (i32, i32, i32) {
    %c0_i32 = arith.constant 0 : i32
    %c0_i32_0 = arith.constant 0 : i32
    return %arg0, %c0_i32, %arg1 : i32, i32, i32
  }
  func.func @transform_5(%arg0: i32, %arg1: i32) -> (i32, i32, i32) {
    %c0_i32 = arith.constant 0 : i32
    %c0_i32_0 = arith.constant 0 : i32
    return %arg0, %c0_i32, %arg1 : i32, i32, i32
  }
  func.func @transform_6(%arg0: i32, %arg1: i32) -> (i32, i32, i32, i32) {
    %c0_i32 = arith.constant 0 : i32
    %c0_i32_0 = arith.constant 0 : i32
    %c0_i32_1 = arith.constant 0 : i32
    return %arg0, %arg1, %c0_i32, %c0_i32_0 : i32, i32, i32, i32
  }
  func.func @transform_7(%arg0: i32, %arg1: i32) -> (i32, i32, i32, i32) {
    %c0_i32 = arith.constant 0 : i32
    %c0_i32_0 = arith.constant 0 : i32
    %c0_i32_1 = arith.constant 0 : i32
    return %arg0, %arg1, %c0_i32, %c0_i32_0 : i32, i32, i32, i32
  }
}

</mosaic_0001>

<llo_original>
// kernel: tpu_custom_call.1
$region0: #{tpu_custom_call.1}
  #allocation0 [shape = 'u32[]', space=smem, size = 0x4, offset = 0x4, fixed_abs, tag = 'smem constant byte address 0x4 - core index']
  #allocation1 [shape = 'u32[144,128]{1,0:T(1,128)}', space=vmem, size = 0x12000, scoped, tag = 'internal scratch']
  %s0 = inlined_call_operand.vmem [shape: f32[2,4,256], index: 0, kind: input, shape index: {}]
  %s1 = inlined_call_operand.vmem [shape: f32[16,4], index: 1, kind: input, shape index: {}]
  %s2 = inlined_call_operand.vmem [shape: f32[4,16], index: 2, kind: input, shape index: {}]
  %s3 = inlined_call_operand.vmem [shape: f32[16,1], index: 3, kind: input, shape index: {}]
  %s4 = inlined_call_operand.hbm [shape: f32[2,4,256], index: 4, kind: output, shape index: {0}]
  %s5 = inlined_call_operand.hbm [shape: s32[2,1,256], index: 5, kind: output, shape index: {1}]
  %s6 = inlined_call_operand.vmem [shape: f32[2,1,1,1], index: 6, kind: output, shape index: {2}]
  %s7 = inlined_call_operand.hbm [shape: f32[2,1,1,16], index: 7, kind: output, shape index: {3}]
  %8 = xla_tuple %s4, %s5, %s6, %s7
  %s9 = sld [smem:[#allocation0]]
  $region73: #{tpu_custom_call.1} parent=0
    _
  %s11 = ssub.s32 1, %s9
  %s12 = scalar_select 0, %s11, %s9
  $region1: #{tpu_custom_call.1} parent=0
    #allocation2 [shape = 'u8[8192]{0}', space=vmem, size = 0x2000, scoped, tag = 'output window, operand 0']
    #allocation3 [shape = 's32[2]{0}', space=sflag, size = 0x8, scoped, tag = 'scoped memory for tpu_custom_call.1']
    #allocation4 [shape = 'u8[2048]{0}', space=vmem, size = 0x800, scoped, tag = 'output window, operand 1']
    #allocation5 [shape = 's32[2]{0}', space=sflag, size = 0x8, scoped, tag = 'scoped memory for tpu_custom_call.1']
    #allocation6 [shape = 'u8[1024]{0}', space=vmem, size = 0x400, scoped, tag = 'output window, operand 3']
    %13 = vsyncpa [#allocation3], 0
    %s14 = scalar_lea.sflag [#allocation3], 1
    %15 = vsyncpa %s14, 0
    %16 = vsyncpa [#allocation5], 0
    %s17 = scalar_lea.sflag [#allocation5], 1
    %18 = vsyncpa %s17, 0
    loop: start=0, step=1, limit=4
    $region2: #{tpu_custom_call.1} parent=1 // loop_pre_header
      _
    $region3: #{tpu_custom_call.1} parent=1 // loop_header
      %s20 = sphi 0, %s24
      %p21 = scmp.ge.s32.totalorder %s20, 4
      %s27 = sphi 0, %s39
      %s28 = sphi 0, %s35
      %s29 = sphi 0, %s27
      %s30 = sphi 0, %s28
      %s31 = sphi 0, %s29
      %s32 = sphi 0, %s30
      %s44 = sphi 0, %s46
      %s47 = sphi 0, %s44
      %s48 = sphi 0, %s47
      %s64 = sphi 0, %s48
      %s68 = sphi 0, %s68
      %s70 = sphi 0, %s68
      %s71 = sphi 0, %s70
      %s85 = sphi 0, %s71
      %s89 = sphi 0, %s89
      %s91 = sphi 0, %s89
      %s92 = sphi 0, %s91
      %s106 = sphi 0, %s92
      %s110 = sphi 0, %s110
      %s112 = sphi 0, %s110
      %s113 = sphi 0, %s112
      %s127 = sphi 0, %s113
      %s135 = sphi 0, %s137
      %s138 = sphi 0, %s135
      %s139 = sphi 0, %s138
      %s155 = sphi 0, %s139
      %s163 = sphi 0, %s165
      %s166 = sphi 0, %s163
      %s167 = sphi 0, %s166
      %s183 = sphi 0, %s167
      %s191 = sphi 0, %s193
      %s194 = sphi 0, %s191
      %s195 = sphi 0, %s194
      %s211 = sphi 0, %s195
      %s219 = sphi 0, %s221
      %s222 = sphi 0, %s219
      %s223 = sphi 0, %s222
      %s239 = sphi 0, %s223
    $region4: #{tpu_custom_call.1} parent=1 // loop_header_branch
      %23 = sbr.rel (%p21) target = $region8
    $region5: #{tpu_custom_call.1} parent=1 // loop_body
      %s25 = ssub.s32 %s20, 1
      %s26 = ssub.s32 %s20, 2
      %s33 = sadd.s32 1, %s28
      %p34 = scmp.ge.s32.totalorder %s33, 1
      %s35 = scalar_select %p34, 0, %s33
      %s36 = sadd.s32 1, %s27
      %s37 = scalar_select %p34, %s36, %s27
      %p38 = scmp.ge.s32.totalorder %s37, 2
      %s39 = scalar_select %p38, 0, %s37
      %s40 = ssub.s32 %s27, %s39
      %s41 = ssub.s32 %s28, %s35
      %s42 = sor.u32 %s40, %s41
      %p43 = scmp.eq.s32.totalorder %s42, 0
      %s45 = sadd.s32 %s44, 1
      %s46 = scalar_select %p43, %s44, %s45
      %p49 = pneg %p43
      %p50 = scmp.eq.s32.totalorder %s20, 1
      %p51 = por %p49, %p50
      %p52 = scmp.ne.s32.totalorder %s44, %s47
      %p53 = scmp.eq.s32.totalorder %s20, 0
      %p54 = por %p52, %p53
      %p55 = scmp.ne.s32.totalorder %s44, %s47
      %p56 = scmp.eq.s32.totalorder %s25, 1
      %p57 = por %p55, %p56
      %p58 = scmp.ne.s32.totalorder %s47, %s48
      %p59 = scmp.eq.s32.totalorder %s25, 0
      %p60 = por %p58, %p59
      %p61 = scmp.ne.s32.totalorder %s47, %s48
      %p62 = scmp.eq.s32.totalorder %s26, 1
      %p63 = por %p61, %p62
      %p65 = scmp.ne.s32.totalorder %s48, %s64
      %p66 = scmp.eq.s32.totalorder %s26, 0
      %p67 = por %p65, %p66
      %s69 = sadd.s32 %s68, 1
      %p72 = scmp.eq.s32.totalorder %s20, 1
      %p73 = scmp.ne.s32.totalorder %s68, %s70
      %p74 = scmp.eq.s32.totalorder %s20, 0
      %p75 = por %p73, %p74
      %p76 = scmp.ne.s32.totalorder %s68, %s70
      %p77 = scmp.eq.s32.totalorder %s25, 1
      %p78 = por %p76, %p77
      %p79 = scmp.ne.s32.totalorder %s70, %s71
      %p80 = scmp.eq.s32.totalorder %s25, 0
      %p81 = por %p79, %p80
      %p82 = scmp.ne.s32.totalorder %s70, %s71
      %p83 = scmp.eq.s32.totalorder %s26, 1
      %p84 = por %p82, %p83
      %p86 = scmp.ne.s32.totalorder %s71, %s85
      %p87 = scmp.eq.s32.totalorder %s26, 0
      %p88 = por %p86, %p87
      %s90 = sadd.s32 %s89, 1
      %p93 = scmp.eq.s32.totalorder %s20, 1
      %p94 = scmp.ne.s32.totalorder %s89, %s91
      %p95 = scmp.eq.s32.totalorder %s20, 0
      %p96 = por %p94, %p95
      %p97 = scmp.ne.s32.totalorder %s89, %s91
      %p98 = scmp.eq.s32.totalorder %s25, 1
      %p99 = por %p97, %p98
      %p100 = scmp.ne.s32.totalorder %s91, %s92
      %p101 = scmp.eq.s32.totalorder %s25, 0
      %p102 = por %p100, %p101
      %p103 = scmp.ne.s32.totalorder %s91, %s92
      %p104 = scmp.eq.s32.totalorder %s26, 1
      %p105 = por %p103, %p104
      %p107 = scmp.ne.s32.totalorder %s92, %s106
      %p108 = scmp.eq.s32.totalorder %s26, 0
      %p109 = por %p107, %p108
      %s111 = sadd.s32 %s110, 1
      %p114 = scmp.eq.s32.totalorder %s20, 1
      %p115 = scmp.ne.s32.totalorder %s110, %s112
      %p116 = scmp.eq.s32.totalorder %s20, 0
      %p117 = por %p115, %p116
      %p118 = scmp.ne.s32.totalorder %s110, %s112
      %p119 = scmp.eq.s32.totalorder %s25, 1
      %p120 = por %p118, %p119
      %p121 = scmp.ne.s32.totalorder %s112, %s113
      %p122 = scmp.eq.s32.totalorder %s25, 0
      %p123 = por %p121, %p122
      %p124 = scmp.ne.s32.totalorder %s112, %s113
      %p125 = scmp.eq.s32.totalorder %s26, 1
      %p126 = por %p124, %p125
      %p128 = scmp.ne.s32.totalorder %s113, %s127
      %p129 = scmp.eq.s32.totalorder %s26, 0
      %p130 = por %p128, %p129
      %s131 = ssub.s32 %s27, %s39
      %s132 = ssub.s32 %s28, %s35
      %s133 = sor.u32 %s131, %s132
      %p134 = scmp.eq.s32.totalorder %s133, 0
      %s136 = sadd.s32 %s135, 1
      %s137 = scalar_select %p134, %s135, %s136
      %p140 = pneg %p134
      %p141 = scmp.eq.s32.totalorder %s20, 1
      %p142 = por %p140, %p141
      %p143 = scmp.ne.s32.totalorder %s135, %s138
      %p144 = scmp.eq.s32.totalorder %s20, 0
      %p145 = por %p143, %p144
      %p146 = scmp.ne.s32.totalorder %s135, %s138
      %p147 = scmp.eq.s32.totalorder %s25, 1
      %p148 = por %p146, %p147
      %p149 = scmp.ne.s32.totalorder %s138, %s139
      %p150 = scmp.eq.s32.totalorder %s25, 0
      %p151 = por %p149, %p150
      %p152 = scmp.ne.s32.totalorder %s138, %s139
      %p153 = scmp.eq.s32.totalorder %s26, 1
      %p154 = por %p152, %p153
      %p156 = scmp.ne.s32.totalorder %s139, %s155
      %p157 = scmp.eq.s32.totalorder %s26, 0
      %p158 = por %p156, %p157
      %s159 = ssub.s32 %s27, %s39
      %s160 = ssub.s32 %s28, %s35
      %s161 = sor.u32 %s159, %s160
      %p162 = scmp.eq.s32.totalorder %s161, 0
      %s164 = sadd.s32 %s163, 1
      %s165 = scalar_select %p162, %s163, %s164
      %p168 = pneg %p162
      %p169 = scmp.eq.s32.totalorder %s20, 1
      %p170 = por %p168, %p169
      %p171 = scmp.ne.s32.totalorder %s163, %s166
      %p172 = scmp.eq.s32.totalorder %s20, 0
      %p173 = por %p171, %p172
      %p174 = scmp.ne.s32.totalorder %s163, %s166
      %p175 = scmp.eq.s32.totalorder %s25, 1
      %p176 = por %p174, %p175
      %p177 = scmp.ne.s32.totalorder %s166, %s167
      %p178 = scmp.eq.s32.totalorder %s25, 0
      %p179 = por %p177, %p178
      %p180 = scmp.ne.s32.totalorder %s166, %s167
      %p181 = scmp.eq.s32.totalorder %s26, 1
      %p182 = por %p180, %p181
      %p184 = scmp.ne.s32.totalorder %s167, %s183
      %p185 = scmp.eq.s32.totalorder %s26, 0
      %p186 = por %p184, %p185
      %s187 = ssub.s32 %s27, %s39
      %s188 = ssub.s32 %s28, %s35
      %s189 = sor.u32 %s187, %s188
      %p190 = scmp.eq.s32.totalorder %s189, 0
      %s192 = sadd.s32 %s191, 1
      %s193 = scalar_select %p190, %s191, %s192
      %p196 = pneg %p190
      %p197 = scmp.eq.s32.totalorder %s20, 1
      %p198 = por %p196, %p197
      %p199 = scmp.ne.s32.totalorder %s191, %s194
      %p200 = scmp.eq.s32.totalorder %s20, 0
      %p201 = por %p199, %p200
      %p202 = scmp.ne.s32.totalorder %s191, %s194
      %p203 = scmp.eq.s32.totalorder %s25, 1
      %p204 = por %p202, %p203
      %p205 = scmp.ne.s32.totalorder %s194, %s195
      %p206 = scmp.eq.s32.totalorder %s25, 0
      %p207 = por %p205, %p206
      %p208 = scmp.ne.s32.totalorder %s194, %s195
      %p209 = scmp.eq.s32.totalorder %s26, 1
      %p210 = por %p208, %p209
      %p212 = scmp.ne.s32.totalorder %s195, %s211
      %p213 = scmp.eq.s32.totalorder %s26, 0
      %p214 = por %p212, %p213
      %s215 = ssub.s32 %s27, %s39
      %s216 = ssub.s32 %s28, %s35
      %s217 = sor.u32 %s215, %s216
      %p218 = scmp.eq.s32.totalorder %s217, 0
      %s220 = sadd.s32 %s219, 1
      %s221 = scalar_select %p218, %s219, %s220
      %p224 = pneg %p218
      %p225 = scmp.eq.s32.totalorder %s20, 1
      %p226 = por %p224, %p225
      %p227 = scmp.ne.s32.totalorder %s219, %s222
      %p228 = scmp.eq.s32.totalorder %s20, 0
      %p229 = por %p227, %p228
      %p230 = scmp.ne.s32.totalorder %s219, %s222
      %p231 = scmp.eq.s32.totalorder %s25, 1
      %p232 = por %p230, %p231
      %p233 = scmp.ne.s32.totalorder %s222, %s223
      %p234 = scmp.eq.s32.totalorder %s25, 0
      %p235 = por %p233, %p234
      %p236 = scmp.ne.s32.totalorder %s222, %s223
      %p237 = scmp.eq.s32.totalorder %s26, 1
      %p238 = por %p236, %p237
      %p240 = scmp.ne.s32.totalorder %s223, %s239
      %p241 = scmp.eq.s32.totalorder %s26, 0
      %p242 = por %p240, %p241
      %p243 = scmp.le.s32.totalorder 1, %s20
      %p244 = scmp.lt.s32.totalorder %s20, 3
      %p245 = pnand %p243, %p244
      %p246 = pneg %p245
      // Predicated region
      $region9: #{tpu_custom_call.1} parent=5 // pred_check
        _
      $region10: #{tpu_custom_call.1} parent=5 // pred_check_branch
        %248 = sbr.rel (%p245) target = $region12
      $region11: #{tpu_custom_call.1} parent=5 // pred_region
        %s249 = ssub.s32 %s20, 1
        // Predicated region
        $region13: #{tpu_custom_call.1} parent=11 // pred_check
          %p250 = pneg %p81
        $region14: #{tpu_custom_call.1} parent=11 // pred_check_branch
          %252 = sbr.rel (%p250) target = $region16
        $region15: #{tpu_custom_call.1} parent=11 // pred_region
          _
        $region16: #{tpu_custom_call.1} parent=11 // pred_fallthru
          _
        // Predicated region
        $region17: #{tpu_custom_call.1} parent=11 // pred_check
          %p253 = pneg %p102
        $region18: #{tpu_custom_call.1} parent=11 // pred_check_branch
          %255 = sbr.rel (%p253) target = $region20
        $region19: #{tpu_custom_call.1} parent=11 // pred_region
          _
        $region20: #{tpu_custom_call.1} parent=11 // pred_fallthru
          _
        // Predicated region
        $region21: #{tpu_custom_call.1} parent=11 // pred_check
          %p256 = pneg %p123
        $region22: #{tpu_custom_call.1} parent=11 // pred_check_branch
          %258 = sbr.rel (%p256) target = $region24
        $region23: #{tpu_custom_call.1} parent=11 // pred_region
          _
        $region24: #{tpu_custom_call.1} parent=11 // pred_fallthru
          _
      $region12: #{tpu_custom_call.1} parent=5 // pred_fallthru
        _
      %p259 = scmp.lt.s32.totalorder %s20, 2
      // Predicated region
      $region25: #{tpu_custom_call.1} parent=5 // pred_check
        %p260 = pneg %p259
      $region26: #{tpu_custom_call.1} parent=5 // pred_check_branch
        %262 = sbr.rel (%p260) target = $region28
      $region27: #{tpu_custom_call.1} parent=5 // pred_region
        // Predicated region
        $region29: #{tpu_custom_call.1} parent=27 // pred_check
          %p263 = pneg %p54
        $region30: #{tpu_custom_call.1} parent=27 // pred_check_branch
          %265 = sbr.rel (%p263) target = $region32
        $region31: #{tpu_custom_call.1} parent=27 // pred_region
          %s266 = smul.u32 2, %s28
          %p267 = scmp.lt.s32.totalorder %s27, 1
          %s268 = scalar_select %p267, %s27, 1
          %p269 = scmp.lt.s32.totalorder %s266, 1
          %s270 = scalar_select %p269, %s266, 1
          %s271 = smul.addr %s268, 2
          %s272 = sadd.s32 %s270, %s271
          %s273 = smul.addr %s272, 4
          %s274 = scalar_lea.vmem %s0, %s273
          %s275 = smul.u32 2, %s28
        $region32: #{tpu_custom_call.1} parent=27 // pred_fallthru
          _
      $region28: #{tpu_custom_call.1} parent=5 // pred_fallthru
        _
      %p276 = scmp.le.s32.totalorder 1, %s20
      %p277 = scmp.lt.s32.totalorder %s20, 3
      %p278 = pnand %p276, %p277
      %p279 = pneg %p278
      // Predicated region
      $region33: #{tpu_custom_call.1} parent=5 // pred_check
        _
      $region34: #{tpu_custom_call.1} parent=5 // pred_check_branch
        %281 = sbr.rel (%p278) target = $region36
      $region35: #{tpu_custom_call.1} parent=5 // pred_region
        %s282 = ssub.s32 %s20, 1
        %s283 = smul.u32 2, %s30
        %p284 = scmp.lt.s32.totalorder %s29, 1
        %s285 = scalar_select %p284, %s29, 1
        %p286 = scmp.lt.s32.totalorder %s283, 1
        %s287 = scalar_select %p286, %s283, 1
        %s288 = smul.addr %s285, 2
        %s289 = sadd.s32 %s287, %s288
        %s290 = smul.addr %s289, 4
        %s291 = scalar_lea.vmem %s0, %s290
        %p292 = pneg %p60
        %p293 = pneg %p57
        %p294 = pneg %p81
        %p295 = pneg %p78
        %p296 = pneg %p102
        %p297 = pneg %p99
        %p298 = pneg %p123
        %p299 = pneg %p120
        %p300 = pneg %p151
        %p301 = pneg %p148
        %s302 = sand.u32 %s138, 1
        %s303 = scalar_lea.sflag [#allocation3], %s302
        %s304 = sand.u32 %s138, 1
        %s305 = smul.addr %s304, 8
        %s306 = scalar_lea.vmem [#allocation2], %s305
        %p307 = pneg %p179
        %p308 = pneg %p176
        %s309 = sand.u32 %s25, 1
        %s310 = scalar_lea.sflag [#allocation5], %s309
        %s311 = sand.u32 %s166, 1
        %s312 = smul.addr %s311, 2
        %s313 = scalar_lea.vmem [#allocation4], %s312
        %p314 = pneg %p207
        %p315 = pneg %p204
        %p316 = scmp.lt.s32.totalorder %s29, 1
        %s317 = scalar_select %p316, %s29, 1
        %p318 = scmp.lt.s32.totalorder %s30, 0
        %s319 = scalar_select %p318, %s30, 0
        %s320 = sadd.s32 %s319, %s317
        %s321 = scalar_lea.vmem %s6, %s320
        %p322 = pneg %p235
        %p323 = pneg %p232
        %s324 = sand.u32 %s25, 1
        %s325 = scalar_lea.sflag [#allocation5], %s324
        %s326 = sand.u32 %s222, 1
        %s327 = scalar_lea.vmem [#allocation6], %s326
        %s328 = smul.u32 2, %s30
        %p329 = scmp.lt.s32.totalorder %s29, 1
        %s330 = scalar_select %p329, %s29, 1
        %p331 = scmp.lt.s32.totalorder %s328, 1
        %s332 = scalar_select %p331, %s328, 1
        %s333 = smul.addr %s330, 2
        %s334 = sadd.s32 %s332, %s333
        %s335 = smul.addr %s334, 4
        %s336 = scalar_lea.vmem %s0, %s335
        %s337 = smul.u32 2, %s30
        %s338 = smul.u32 2, %s30
        %s339 = smul.u32 2, %s30
        %p340 = scmp.lt.s32.totalorder %s29, 1
        %s341 = scalar_select %p340, %s29, 1
        %p342 = scmp.lt.s32.totalorder %s30, 0
        %s343 = scalar_select %p342, %s30, 0
        %s344 = sadd.s32 %s343, %s341
        %s345 = scalar_lea.vmem %s6, %s344
        %v346 = vld [vmem:[%s336] sm:$0xff]
        %v347 = vld [vmem:[%s1] sm:$0xff]
        %v348 = vld [vmem:[%s1 + $0x8] sm:$0xff]
        %v349 = vld [vmem:[%s2] sm:$0xf]
        %v350 = vld [vmem:[%s3] sm:$0xff]
        %v351 = vld [vmem:[%s3 + $0x8] sm:$0xff]
        %v353 = vcombine.high %v346, %v346
        %vm354 = vcmask 31744
        %v356 = vsel %vm354, %v347, 0
        %v359 = vsel %vm354, %v348, 0
        %vm361 = vcmask 1043456
        %v362 = vsel %vm361, %v346, 0
        %v364 = vsel %vm361, %v353, 0
        %366 = vmatprep.subr.mxu0 %v364
        %367 = vmatpush1.msra.mxu0 %v362
        %368 = vmatprep.subr.mxu0 0.0
        %369 = vmatpush1.msra.mxu0 0.0
        %370 = vmatprep.subr.mxu0 0.0
        %371 = vmatpush1.msra.mxu0 0.0
        %372 = vmatprep.subr.mxu0 0.0
        %373 = vmatpush1.msra.mxu0 0.0
        %374 = vmatprep.subr.mxu0 0.0
        %375 = vmatpush1.msra.mxu0 0.0
        %376 = vmatprep.subr.mxu0 0.0
        %377 = vmatpush1.msra.mxu0 0.0
        %378 = vmatprep.subr.mxu0 0.0
        %379 = vmatpush1.msra.mxu0 0.0
        %380 = vmatprep.subr.mxu0 0.0
        %381 = vmatpush1.msra.mxu0 0.0
        %382 = vmatprep.subr.mxu0 0.0
        %383 = vmatpush1.msra.mxu0 0.0
        %384 = vmatprep.subr.mxu0 0.0
        %385 = vmatpush1.msra.mxu0 0.0
        %386 = vmatprep.subr.mxu0 0.0
        %387 = vmatpush1.msra.mxu0 0.0
        %388 = vmatprep.subr.mxu0 0.0
        %389 = vmatpush1.msra.mxu0 0.0
        %390 = vmatprep.subr.mxu0 0.0
        %391 = vmatpush1.msra.mxu0 0.0
        %392 = vmatprep.subr.mxu0 0.0
        %393 = vmatpush1.msra.mxu0 0.0
        %394 = vmatprep.subr.mxu0 0.0
        %395 = vmatpush1.msra.mxu0 0.0
        %396 = vmatprep.subr.mxu0 0.0
        %397 = vmatpush1.msra.mxu0 0.0
        %398 = vmatprep.subr.mxu0 0.0
        %399 = vmatpush1.msra.mxu0 0.0
        %400 = vmatprep.subr.mxu0 0.0
        %401 = vmatpush1.msra.mxu0 0.0
        %402 = vmatprep.subr.mxu0 0.0
        %403 = vmatpush1.msra.mxu0 0.0
        %404 = vmatprep.subr.mxu0 0.0
        %405 = vmatpush1.msra.mxu0 0.0
        %406 = vmatprep.subr.mxu0 0.0
        %407 = vmatpush1.msra.mxu0 0.0
        %408 = vmatprep.subr.mxu0 0.0
        %409 = vmatpush1.msra.mxu0 0.0
        %410 = vmatprep.subr.mxu0 0.0
        %411 = vmatpush1.msra.mxu0 0.0
        %412 = vmatprep.subr.mxu0 0.0
        %413 = vmatpush1.msra.mxu0 0.0
        %414 = vmatprep.subr.mxu0 0.0
        %415 = vmatpush1.msra.mxu0 0.0
        %416 = vmatprep.subr.mxu0 0.0
        %417 = vmatpush1.msra.mxu0 0.0
        %418 = vmatprep.subr.mxu0 0.0
        %419 = vmatpush1.msra.mxu0 0.0
        %420 = vmatprep.subr.mxu0 0.0
        %421 = vmatpush1.msra.mxu0 0.0
        %422 = vmatprep.subr.mxu0 0.0
        %423 = vmatpush1.msra.mxu0 0.0
        %424 = vmatprep.subr.mxu0 0.0
        %425 = vmatpush1.msra.mxu0 0.0
        %426 = vmatprep.subr.mxu0 0.0
        %427 = vmatpush1.msra.mxu0 0.0
        %428 = vmatprep.subr.mxu0 0.0
        %429 = vmatpush1.msra.mxu0 0.0
        %430 = vmatprep.mubr.f32.mxu0 0.0
        %431 = vmatmul.mubr.f32.gmra.mrb[0].mxu0 %v356
        %v432 = vpop.f32.mrb[0].mxu0
        %v433 = vadd.f32 0.0, %v432
        %v434 = vpop.f32.mrb[0].mxu0
        %v435 = vadd.f32 0.0, %v434
        %436 = vmatprep.mubr.f32.mxu0 0.0
        %437 = vmatmul.mubr.f32.gmra.mrb[0].mxu0 %v359
        %v438 = vpop.f32.mrb[0].mxu0
        %v439 = vadd.f32 0.0, %v438
        %v440 = vpop.f32.mrb[0].mxu0
        %v441 = vadd.f32 0.0, %v440
        %442 = vdwg.mxu0
        %444 = vset.pattern.permute.xlu0 0
        %445 = vperm.xlu0 %444, %v350
        %v446 = vpop.permute.xlu0 %445
        %449 = vset.pattern.permute.xlu0 0
        %450 = vperm.xlu0 %449, %v351
        %v451 = vpop.permute.xlu0 %450
        %v453 = vadd.f32 %v446, %v433
        %v454 = vadd.f32 %v446, %v435
        %v455 = vadd.f32 %v451, %v439
        %v456 = vadd.f32 %v451, %v441
        %v457 = vlaneseq
        %v458 = vshrl.u32 %v457, 7
        %v459 = vadd.s32 %v458, 8
        %v460 = vmin.f32 %v453, %v455
        %v461 = vrot.slane %v460, 4
        %v462 = vmin.f32 %v460, %v461
        %v463 = vrot.slane %v462, 2
        %v464 = vmin.f32 %v462, %v463
        %v465 = vrot.slane %v464, 1
        %v466 = vmin.f32 %v464, %v465
        %v467 = vmin.f32 %v454, %v456
        %v468 = vrot.slane %v467, 4
        %v469 = vmin.f32 %v467, %v468
        %v470 = vrot.slane %v469, 2
        %v471 = vmin.f32 %v469, %v470
        %v472 = vrot.slane %v471, 1
        %v473 = vmin.f32 %v471, %v472
        %vm474 = vcmp.eq.f32.partialorder %v453, %v466
        %vm475 = vcmp.eq.f32.partialorder %v454, %v473
        %vm476 = vcmp.eq.f32.partialorder %v455, %v466
        %vm477 = vcmp.eq.f32.partialorder %v456, %v473
        %v478 = vsel %vm474, %v458, 16
        %v479 = vsel %vm475, %v458, 16
        %v480 = vsel %vm476, %v459, 16
        %v481 = vsel %vm477, %v459, 16
        %vm482 = vcmp.lt.s32.totalorder %v478, %v480
        %v483 = vsel %vm482, %v478, %v480
        %v484 = vrot.slane %v483, 4
        %vm485 = vcmp.lt.s32.totalorder %v483, %v484
        %v486 = vsel %vm485, %v483, %v484
        %v487 = vrot.slane %v486, 2
        %vm488 = vcmp.lt.s32.totalorder %v486, %v487
        %v489 = vsel %vm488, %v486, %v487
        %v490 = vrot.slane %v489, 1
        %vm491 = vcmp.lt.s32.totalorder %v489, %v490
        %v492 = vsel %vm491, %v489, %v490
        %vm493 = vcmp.lt.s32.totalorder %v479, %v481
        %v494 = vsel %vm493, %v479, %v481
        %v495 = vrot.slane %v494, 4
        %vm496 = vcmp.lt.s32.totalorder %v494, %v495
        %v497 = vsel %vm496, %v494, %v495
        %v498 = vrot.slane %v497, 2
        %vm499 = vcmp.lt.s32.totalorder %v497, %v498
        %v500 = vsel %vm499, %v497, %v498
        %v501 = vrot.slane %v500, 1
        %vm502 = vcmp.lt.s32.totalorder %v500, %v501
        %v503 = vsel %vm502, %v500, %v501
        %vm504 = vcmp.eq.s32.totalorder %v458, %v492
        %vm505 = vcmp.eq.s32.totalorder %v458, %v503
        %vm506 = vcmp.eq.s32.totalorder %v459, %v492
        %vm507 = vcmp.eq.s32.totalorder %v459, %v503
        %v508 = vsel %vm504, 1, 0
        %v509 = vsel %vm505, 1, 0
        %v510 = vsel %vm506, 1, 0
        %v511 = vsel %vm507, 1, 0
        %v512 = vcvt.s32.f32 %v508
        %v513 = vcvt.s32.f32 %v509
        %v514 = vcvt.s32.f32 %v510
        %v515 = vcvt.s32.f32 %v511
        %vm516 = vcmask 130048
        %v518 = vsel %vm516, %v349, 0
        %520 = vmatprep.subr.mxu0 %v513
        %521 = vmatpush1.msra.mxu0 %v512
        %522 = vmatprep.subr.mxu0 %v515
        %523 = vmatpush1.msra.mxu0 %v514
        %524 = vmatprep.subr.mxu0 0.0
        %525 = vmatpush1.msra.mxu0 0.0
        %526 = vmatprep.subr.mxu0 0.0
        %527 = vmatpush1.msra.mxu0 0.0
        %528 = vmatprep.subr.mxu0 0.0
        %529 = vmatpush1.msra.mxu0 0.0
        %530 = vmatprep.subr.mxu0 0.0
        %531 = vmatpush1.msra.mxu0 0.0
        %532 = vmatprep.subr.mxu0 0.0
        %533 = vmatpush1.msra.mxu0 0.0
        %534 = vmatprep.subr.mxu0 0.0
        %535 = vmatpush1.msra.mxu0 0.0
        %536 = vmatprep.subr.mxu0 0.0
        %537 = vmatpush1.msra.mxu0 0.0
        %538 = vmatprep.subr.mxu0 0.0
        %539 = vmatpush1.msra.mxu0 0.0
        %540 = vmatprep.subr.mxu0 0.0
        %541 = vmatpush1.msra.mxu0 0.0
        %542 = vmatprep.subr.mxu0 0.0
        %543 = vmatpush1.msra.mxu0 0.0
        %544 = vmatprep.subr.mxu0 0.0
        %545 = vmatpush1.msra.mxu0 0.0
        %546 = vmatprep.subr.mxu0 0.0
        %547 = vmatpush1.msra.mxu0 0.0
        %548 = vmatprep.subr.mxu0 0.0
        %549 = vmatpush1.msra.mxu0 0.0
        %550 = vmatprep.subr.mxu0 0.0
        %551 = vmatpush1.msra.mxu0 0.0
        %552 = vmatprep.subr.mxu0 0.0
        %553 = vmatpush1.msra.mxu0 0.0
        %554 = vmatprep.subr.mxu0 0.0
        %555 = vmatpush1.msra.mxu0 0.0
        %556 = vmatprep.subr.mxu0 0.0
        %557 = vmatpush1.msra.mxu0 0.0
        %558 = vmatprep.subr.mxu0 0.0
        %559 = vmatpush1.msra.mxu0 0.0
        %560 = vmatprep.subr.mxu0 0.0
        %561 = vmatpush1.msra.mxu0 0.0
        %562 = vmatprep.subr.mxu0 0.0
        %563 = vmatpush1.msra.mxu0 0.0
        %564 = vmatprep.subr.mxu0 0.0
        %565 = vmatpush1.msra.mxu0 0.0
        %566 = vmatprep.subr.mxu0 0.0
        %567 = vmatpush1.msra.mxu0 0.0
        %568 = vmatprep.subr.mxu0 0.0
        %569 = vmatpush1.msra.mxu0 0.0
        %570 = vmatprep.subr.mxu0 0.0
        %571 = vmatpush1.msra.mxu0 0.0
        %572 = vmatprep.subr.mxu0 0.0
        %573 = vmatpush1.msra.mxu0 0.0
        %574 = vmatprep.subr.mxu0 0.0
        %575 = vmatpush1.msra.mxu0 0.0
        %576 = vmatprep.subr.mxu0 0.0
        %577 = vmatpush1.msra.mxu0 0.0
        %578 = vmatprep.subr.mxu0 0.0
        %579 = vmatpush1.msra.mxu0 0.0
        %580 = vmatprep.subr.mxu0 0.0
        %581 = vmatpush1.msra.mxu0 0.0
        %582 = vmatprep.subr.mxu0 0.0
        %583 = vmatpush1.msra.mxu0 0.0
        %584 = vmatprep.mubr.f32.mxu0 0.0
        %585 = vmatmul.mubr.f32.gmra.mrb[0].mxu0 %v518
        %v586 = vpop.f32.mrb[0].mxu0
        %v587 = vadd.f32 0.0, %v586
        %v588 = vpop.f32.mrb[0].mxu0
        %v589 = vadd.f32 0.0, %v588
        %590 = vdwg.mxu0
        %v593 = vcombine.low %v587, %v589
        %595 = vst [vmem:[%s306] sm:$0xff] %v593
        %v596 = vcombine.low %v492, %v503
        %v598 = vunpack.c.l.s4 1966171168
        %v599 = vunpack.c.0.s8 %v598
        %v600 = vlaneseq
        %v601 = vshrl.u32 %v600, 7
        %v602 = vsub.s32 %v599, %v601
        %v603 = vrot.slane %v596, %v602
        %v605 = vunpack.c.l.s4 1966171168
        %v606 = vunpack.c.0.s8 %v605
        %v607 = vlaneseq
        %v608 = vshrl.u32 %v607, 7
        %v609 = vsub.s32 %v606, %v608
        %v610 = vrot.slane %v603, %v609
        %v611 = vlaneseq
        %vm612 = vcmp.ge.s32.totalorder %v611, 0
        %vm613 = vcmp.lt.s32.totalorder %v611, 256
        %vm614 = vmand %vm612, %vm613
        %615 = vst.msk [vmem:[%s313] sm:$0x3] %vm614, %v610
        %v616 = vmul.f32 %v346, %v346
        %v618 = vcombine.high %v616, %v616
        %v620 = vsel %vm361, %v616, 0.0
        %v621 = vrot.slane %v620, 4
        %v622 = vadd.f32 %v620, %v621
        %v623 = vrot.slane %v622, 2
        %v624 = vadd.f32 %v622, %v623
        %v625 = vrot.slane %v624, 1
        %v626 = vadd.f32 %v624, %v625
        %v627 = vsel %vm361, %v618, 0.0
        %v628 = vrot.slane %v627, 4
        %v629 = vadd.f32 %v627, %v628
        %v630 = vrot.slane %v629, 2
        %v631 = vadd.f32 %v629, %v630
        %v632 = vrot.slane %v631, 1
        %v633 = vadd.f32 %v631, %v632
        %v634 = vadd.f32 %v466, %v626
        %v635 = vadd.f32 %v473, %v633
        %v636 = vadd.f32 %v634, %v635
        %637 = vadd.xlane.f32.xlu0 %v636
        %v638 = vpop.xlane.xlu0 %637
        %vm639 = vcmask 0
        %640 = vst.msk [vmem:[%s345] sm:$0x1] %vm639, %v638
        %v641 = vadd.f32 %v512, %v513
        %642 = vadd.xlane.f32.xlu0 %v641
        %v643 = vpop.xlane.xlu0 %642
        %v644 = vadd.f32 %v514, %v515
        %645 = vadd.xlane.f32.xlu0 %v644
        %v646 = vpop.xlane.xlu0 %645
        %v649 = vlaneseq
        %v650 = vand.u32 %v649, 127
        %v651 = vlaneseq
        %v652 = vshrl.u32 %v651, 7
        %v653 = vsub.s32 %v650, %v652
        %v654 = vrot.slane %v643, %v653
        %v655 = vadd.s32 %v650, 4294967288
        %v656 = vlaneseq
        %v657 = vshrl.u32 %v656, 7
        %v658 = vsub.s32 %v655, %v657
        %v659 = vrot.slane %v646, %v658
        %vm660 = vcmask 130112
        %v661 = vsel %vm660, %v659, %v654
        %vm663 = vcmask 122880
        %664 = vst.msk [vmem:[%s327] sm:$0x1] %vm663, %v661
        %s665 = sand.u32 %s138, 1
        %s666 = scalar_lea.sflag [#allocation3], %s665
        %s667 = sand.u32 %s138, 1
        %s668 = smul.addr %s667, 8
        %s669 = scalar_lea.vmem [#allocation2], %s668
        %s670 = sand.u32 %s25, 1
        %s671 = scalar_lea.sflag [#allocation5], %s670
        %s672 = sand.u32 %s166, 1
        %s673 = smul.addr %s672, 2
        %s674 = scalar_lea.vmem [#allocation4], %s673
        %p675 = scmp.lt.s32.totalorder %s29, 1
        %s676 = scalar_select %p675, %s29, 1
        %p677 = scmp.lt.s32.totalorder %s30, 0
        %s678 = scalar_select %p677, %s30, 0
        %s679 = sadd.s32 %s678, %s676
        %s680 = scalar_lea.vmem %s6, %s679
        %s681 = sand.u32 %s25, 1
        %s682 = scalar_lea.sflag [#allocation5], %s681
        %s683 = sand.u32 %s222, 1
        %s684 = scalar_lea.vmem [#allocation6], %s683
        // Predicated region
        $region37: #{tpu_custom_call.1} parent=35 // pred_check
          %p685 = pneg %p148
        $region38: #{tpu_custom_call.1} parent=35 // pred_check_branch
          %687 = sbr.rel (%p685) target = $region40
        $region39: #{tpu_custom_call.1} parent=35 // pred_region
          %s688 = smul.u32 2, %s30
          %s690 = ssub.s32 128, 128
          %691 = vsyncadd %s666, %s690
          %s692 = smul.addr %s29, 2
          %s693 = sadd.s32 %s688, %s692
          %s694 = smul.addr %s693, 64
          %s695 = scalar_lea.hbm %s4, %s694
          %s697 = sshll.u32 %s669, 4
          %s698 = int_to_ptr.vmem [resolvable:$true] %s697
          %700 = dma.vmem_to_hbm [thread:$0]  %s698, 128, %s695, %s666
        $region40: #{tpu_custom_call.1} parent=35 // pred_fallthru
          _
        // Predicated region
        $region41: #{tpu_custom_call.1} parent=35 // pred_check
          %p701 = pneg %p176
        $region42: #{tpu_custom_call.1} parent=35 // pred_check_branch
          %703 = sbr.rel (%p701) target = $region44
        $region43: #{tpu_custom_call.1} parent=35 // pred_region
          %s704 = smul.u32 2, %s30
          %s706 = ssub.s32 32, 32
          %707 = vsyncadd %s671, %s706
          %s708 = smul.addr %s29, 2
          %s709 = sadd.s32 %s704, %s708
          %s710 = smul.addr %s709, 16
          %s711 = scalar_lea.hbm %s5, %s710
          %s713 = sshll.u32 %s674, 4
          %s714 = int_to_ptr.vmem [resolvable:$true] %s713
          %716 = dma.vmem_to_hbm [thread:$0]  %s714, 32, %s711, %s671
        $region44: #{tpu_custom_call.1} parent=35 // pred_fallthru
          _
        // Predicated region
        $region45: #{tpu_custom_call.1} parent=35 // pred_check
          %p717 = pneg %p204
        $region46: #{tpu_custom_call.1} parent=35 // pred_check_branch
          %719 = sbr.rel (%p717) target = $region48
        $region47: #{tpu_custom_call.1} parent=35 // pred_region
          _
        $region48: #{tpu_custom_call.1} parent=35 // pred_fallthru
          _
        // Predicated region
        $region49: #{tpu_custom_call.1} parent=35 // pred_check
          %p720 = pneg %p232
        $region50: #{tpu_custom_call.1} parent=35 // pred_check_branch
          %722 = sbr.rel (%p720) target = $region52
        $region51: #{tpu_custom_call.1} parent=35 // pred_region
          %s724 = ssub.s32 16, 16
          %725 = vsyncadd %s682, %s724
          %s726 = sadd.s32 %s30, %s29
          %s727 = smul.addr %s726, 16
          %s728 = scalar_lea.hbm %s7, %s727
          %s730 = sshll.u32 %s684, 4
          %s731 = int_to_ptr.vmem [resolvable:$true] %s730
          %733 = dma.vmem_to_hbm [thread:$0]  %s731, 16, %s728, %s682
        $region52: #{tpu_custom_call.1} parent=35 // pred_fallthru
          _
      $region36: #{tpu_custom_call.1} parent=5 // pred_fallthru
        _
      %p734 = scmp.le.s32.totalorder 2, %s20
      // Predicated region
      $region53: #{tpu_custom_call.1} parent=5 // pred_check
        %p735 = pneg %p734
      $region54: #{tpu_custom_call.1} parent=5 // pred_check_branch
        %737 = sbr.rel (%p735) target = $region56
      $region55: #{tpu_custom_call.1} parent=5 // pred_region
        %s738 = ssub.s32 %s20, 2
        // Predicated region
        $region57: #{tpu_custom_call.1} parent=55 // pred_check
          %p739 = pneg %p154
        $region58: #{tpu_custom_call.1} parent=55 // pred_check_branch
          %741 = sbr.rel (%p739) target = $region60
        $region59: #{tpu_custom_call.1} parent=55 // pred_region
          %s742 = sand.u32 %s139, 1
          %s743 = scalar_lea.sflag [#allocation3], %s742
          %s744 = sand.u32 %s139, 1
          %s745 = smul.addr %s744, 8
          %s746 = scalar_lea.vmem [#allocation2], %s745
          %747 = dma.done %s743, 128
        $region60: #{tpu_custom_call.1} parent=55 // pred_fallthru
          _
        // Predicated region
        $region61: #{tpu_custom_call.1} parent=55 // pred_check
          %p748 = pneg %p182
        $region62: #{tpu_custom_call.1} parent=55 // pred_check_branch
          %750 = sbr.rel (%p748) target = $region64
        $region63: #{tpu_custom_call.1} parent=55 // pred_region
          %s751 = sand.u32 %s26, 1
          %s752 = scalar_lea.sflag [#allocation5], %s751
          %s753 = sand.u32 %s167, 1
          %s754 = smul.addr %s753, 2
          %s755 = scalar_lea.vmem [#allocation4], %s754
          %756 = dma.done %s752, 32
        $region64: #{tpu_custom_call.1} parent=55 // pred_fallthru
          _
        // Predicated region
        $region65: #{tpu_custom_call.1} parent=55 // pred_check
          %p757 = pneg %p210
        $region66: #{tpu_custom_call.1} parent=55 // pred_check_branch
          %759 = sbr.rel (%p757) target = $region68
        $region67: #{tpu_custom_call.1} parent=55 // pred_region
          %p760 = scmp.lt.s32.totalorder %s31, 1
          %s761 = scalar_select %p760, %s31, 1
          %p762 = scmp.lt.s32.totalorder %s32, 0
          %s763 = scalar_select %p762, %s32, 0
          %s764 = sadd.s32 %s763, %s761
          %s765 = scalar_lea.vmem %s6, %s764
        $region68: #{tpu_custom_call.1} parent=55 // pred_fallthru
          _
        // Predicated region
        $region69: #{tpu_custom_call.1} parent=55 // pred_check
          %p766 = pneg %p238
        $region70: #{tpu_custom_call.1} parent=55 // pred_check_branch
          %768 = sbr.rel (%p766) target = $region72
        $region71: #{tpu_custom_call.1} parent=55 // pred_region
          %s769 = sand.u32 %s26, 1
          %s770 = scalar_lea.sflag [#allocation5], %s769
          %s771 = sand.u32 %s223, 1
          %s772 = scalar_lea.vmem [#allocation6], %s771
          %773 = dma.done %s770, 16
        $region72: #{tpu_custom_call.1} parent=55 // pred_fallthru
          _
      $region56: #{tpu_custom_call.1} parent=5 // pred_fallthru
        _
    $region6: #{tpu_custom_call.1} parent=1 // loop_footer
      %s24 = sadd.s32 1, %s20
    $region7: #{tpu_custom_call.1} parent=1 // loop_footer_branch
      %19 = sbr.rel target = $region3
    $region8: #{tpu_custom_call.1} parent=1 // loop_exit
      _
    %774 = vsyncpa [#allocation3], 1
    %s775 = scalar_lea.sflag [#allocation3], 1
    %776 = vsyncpa %s775, 1
    %777 = vsyncpa [#allocation5], 1
    %s778 = scalar_lea.sflag [#allocation5], 1
    %779 = vsyncpa %s778, 1

</llo_original>
